<compile_context>
chip_gen: v7x
topology: tpu7x:2x2x1
jax: 0.10.0
libtpu: 0.0.40
codegen_flags: <defaults>
</compile_context>

<pallas_src>
import functools

import jax
import jax.numpy as jnp
from jax import lax
from jax.experimental import pallas as pl
from jax.experimental.pallas import tpu as pltpu


def _mse_kernel(pred_ref, real_ref, acc_ref, *, rows, tile_m, bph,
                full_blocks, any_masked):
    """One grid step: accumulate per-lane partial sums of (real - pred)**2."""
    s = pl.program_id(0)          # core split (size 1 unless requested)
    j = pl.program_id(1)          # reduction step within the split

    @pl.when(j == 0)
    def _():
        acc_ref[...] = jnp.zeros_like(acc_ref)

    def accumulate(apply_row_mask):
        # Native-dtype DMA; cast to f32 on the VPU.
        d = real_ref[...].astype(jnp.float32) - pred_ref[...].astype(jnp.float32)
        if apply_row_mask:
            b = s * bph + j
            row_ids = b * tile_m + lax.broadcasted_iota(jnp.int32, d.shape, 0)
            d = jnp.where(row_ids < rows, d, 0.0)
        sq = d * d
        if tile_m % 8 == 0:
            # Fold sublane groups of 8 rows; accumulate (8, lanes) partials.
            acc_ref[...] += jnp.sum(
                sq.reshape(tile_m // 8, 8, sq.shape[-1]), axis=0)
        else:
            # Tiny-input fallback: the tile is the whole (small) array.
            acc_ref[...] += sq

    if any_masked:
        b = s * bph + j
        # Steady-state tiles stay mask-free (pure load/sub/mul/add); only the
        # ragged last tile and clamped overshoot tiles pay the mask.
        @pl.when(b < full_blocks)
        def _():
            accumulate(False)

        @pl.when(b >= full_blocks)
        def _():
            accumulate(True)
    else:
        accumulate(False)


def _physical_vmem_bytes(default=64 * 1024 * 1024):
    """Best-effort physical-VMEM query; falls back to the smallest chip."""
    try:
        info_fn = getattr(pltpu, "get_tpu_info", None)
        if info_fn is not None:
            v = getattr(info_fn(), "vmem_capacity_bytes", None)
            if v:
                return int(v)
    except Exception:
        pass
    return default


def mse_pallas(pred, real, *, num_core_splits=1):
    """sum((real - pred)**2) / numel  — matches the PyTorch MSE module.

    num_core_splits=2 shards the reduction across the two TensorCores of a
    v7x chip (CORE_PARALLEL leading grid axis).  Leave at 1 on v5e / v6e.
    """
    assert pred.shape == real.shape, "pred and real must have the same shape"
    n = int(pred.size)
    assert n > 0

    p = pred.reshape(-1)
    r = real.reshape(-1)

    # Lane-dense slab: wide lanes (long contiguous DMAs) for big inputs,
    # 128 lanes for small ones.
    lanes = 512 if (n % 512 == 0 and n >= 512 * 8) else 128
    rows = pl.cdiv(n, lanes)
    padded = rows * lanes
    if padded != n:
        # Only hit when numel isn't a multiple of 128; padded zeros add 0 to
        # the sum (the 1/n below uses the true n).
        p = jnp.pad(p, (0, padded - n))
        r = jnp.pad(r, (0, padded - n))
    p2 = p.reshape(rows, lanes)
    r2 = r.reshape(rows, lanes)

    # Tile sizing: pure HBM streaming, so the only cost besides bytes is the
    # ~0.35 us per-grid-step overhead.  8 MiB(f32)/input tiles on 128 MiB-VMEM
    # chips (v5e/v6e), 6 MiB on 64 MiB chips (v7x).  With double-buffering the
    # input working set is 4x tile_bytes, so raise the scoped-VMEM limit
    # accordingly while keeping headroom below physical.
    phys_vmem = _physical_vmem_bytes()
    tile_bytes = (8 << 20) if phys_vmem >= (96 << 20) else (6 << 20)
    target_rows = tile_bytes // (lanes * 4)
    tile_m = rows if rows <= target_rows else target_rows
    vmem_limit = max(
        min(phys_vmem - (12 << 20), 4 * tile_bytes + (16 << 20)),
        32 << 20,
    )

    num_blocks = pl.cdiv(rows, tile_m)

    # Optional core split (only pays off when it genuinely shards across
    # TensorCores, i.e. v7x with CORE_PARALLEL; off by default).
    nsplit = num_core_splits if (
        num_core_splits > 1 and tile_m % 8 == 0
        and num_blocks >= num_core_splits) else 1
    bph = pl.cdiv(num_blocks, nsplit)            # reduction blocks per split

    # Blocks whose rows are entirely in-range need no mask; the ragged last
    # block and any clamped overshoot block of the last split do.
    full_blocks = rows // tile_m
    any_masked = (nsplit * bph) != full_blocks

    acc_rows = 8 if tile_m % 8 == 0 else tile_m

    def in_map(s, j):
        # Clamp so a fully-out-of-range trailing tile of the last split
        # re-reads the last in-range block; the in-kernel row mask zeroes it.
        return (jnp.minimum(s * bph + j, num_blocks - 1), 0)

    kernel = functools.partial(
        _mse_kernel, rows=rows, tile_m=tile_m, bph=bph,
        full_blocks=full_blocks, any_masked=any_masked)

    if nsplit > 1:
        lead_sem = getattr(pltpu, "CORE_PARALLEL", "parallel")
    else:
        lead_sem = "arbitrary"

    itemsize = max(pred.dtype.itemsize, real.dtype.itemsize)
    cost = pl.CostEstimate(
        flops=3 * n,
        transcendentals=0,
        bytes_accessed=2 * n * itemsize + nsplit * acc_rows * lanes * 4,
    )

    partials = pl.pallas_call(
        kernel,
        out_shape=jax.ShapeDtypeStruct((nsplit * acc_rows, lanes), jnp.float32),
        grid_spec=pltpu.PrefetchScalarGridSpec(
            num_scalar_prefetch=0,
            grid=(nsplit, bph),
            in_specs=[
                pl.BlockSpec((tile_m, lanes), in_map),
                pl.BlockSpec((tile_m, lanes), in_map),
            ],
            # Same out block across the reduction axis -> resident accumulator.
            out_specs=pl.BlockSpec((acc_rows, lanes), lambda s, j: (s, 0)),
        ),
        compiler_params=pltpu.CompilerParams(
            dimension_semantics=(lead_sem, "arbitrary"),
            vmem_limit_bytes=int(vmem_limit),
        ),
        cost_estimate=cost,
    )(p2, r2)

    # Single final cross-lane reduce + mean (tiny) in plain JAX.
    # NOTE: accumulation is plain f32; for very large inputs (~1e8+ elements)
    # expect small drift vs a float64 reference.
    return jnp.sum(partials) / n


if __name__ == "__main__":
    key = jax.random.PRNGKey(0)
    k1, k2 = jax.random.split(key)
    shape = (2, 4, 16, 16)  # NCHW, small synthetic shapes
    pred = jax.random.normal(k1, shape, dtype=jnp.float32)
    real = jax.random.normal(k2, shape, dtype=jnp.float32)

    mse = mse_pallas(pred, real)
    jax.block_until_ready(mse)

    # sanity check against plain-JAX reference
    ref = jnp.sum((real - pred) ** 2) / pred.size
    assert jnp.allclose(mse, ref, rtol=1e-5, atol=1e-6), (mse, ref)

    print("KERNEL_OK")
</pallas_src>

<mosaic_0001>
module attributes {stable_mosaic.version = 11 : i64} {
  func.func @_mse_kernel(%arg0: i32, %arg1: i32, %arg2: memref<16x128xf32, #tpu.memory_space<vmem>>, %arg3: memref<16x128xf32, #tpu.memory_space<vmem>>, %arg4: memref<8x128xf32, #tpu.memory_space<vmem>>) attributes {dimension_semantics = [#tpu.dimension_semantics<arbitrary>, #tpu.dimension_semantics<arbitrary>], iteration_bounds = array<i64: 1, 1>, scalar_prefetch = 0 : i64, scratch_operands = 0 : i64, tpu.core_type = #tpu.core_type<tc>, window_params = [{transform_indices = @transform_0, window_bounds = array<i64: 16, 128>}, {transform_indices = @transform_1, window_bounds = array<i64: 16, 128>}, {transform_indices = @transform_2, window_bounds = array<i64: 8, 128>}]} {
    %c0_i32 = arith.constant 0 : i32
    %0 = arith.cmpi eq, %arg1, %c0_i32 : i32
    %1 = arith.extui %0 : i1 to i32
    %c0_i32_0 = arith.constant 0 : i32
    %2 = arith.cmpi ne, %1, %c0_i32_0 : i32
    scf.if %2 {
      %cst_8 = arith.constant 0.000000e+00 : f32
      %12 = vector.broadcast %cst_8 : f32 to vector<8x128xf32>
      %c0_9 = arith.constant 0 : index
      %c0_10 = arith.constant 0 : index
      %13 = vector.load %arg4[%c0_9, %c0_10] : memref<8x128xf32, #tpu.memory_space<vmem>>, vector<8x128xf32>
      tpu.vector_store %arg4[%c0_9, %c0_10], %12 {strides = array<i32>} : memref<8x128xf32, #tpu.memory_space<vmem>>, vector<8x128xf32>,
    } else {
    }
    %c0 = arith.constant 0 : index
    %c0_1 = arith.constant 0 : index
    %3 = vector.load %arg3[%c0, %c0_1] : memref<16x128xf32, #tpu.memory_space<vmem>>, vector<16x128xf32>
    %c0_2 = arith.constant 0 : index
    %c0_3 = arith.constant 0 : index
    %4 = vector.load %arg2[%c0_2, %c0_3] : memref<16x128xf32, #tpu.memory_space<vmem>>, vector<16x128xf32>
    %5 = arith.subf %3, %4 : vector<16x128xf32>
    %6 = arith.mulf %5, %5 : vector<16x128xf32>
    %c0_4 = arith.constant 0 : index
    %c0_5 = arith.constant 0 : index
    %7 = vector.load %arg4[%c0_4, %c0_5] : memref<8x128xf32, #tpu.memory_space<vmem>>, vector<8x128xf32>
    %8 = vector.shape_cast %6 : vector<16x128xf32> to vector<2x8x128xf32>
    %cst = arith.constant dense<0.000000e+00> : vector<8x128xf32>
    %9 = vector.multi_reduction <add>, %8, %cst [0] : vector<2x8x128xf32> to vector<8x128xf32>
    %10 = arith.addf %7, %9 : vector<8x128xf32>
    %c0_6 = arith.constant 0 : index
    %c0_7 = arith.constant 0 : index
    %11 = vector.load %arg4[%c0_6, %c0_7] : memref<8x128xf32, #tpu.memory_space<vmem>>, vector<8x128xf32>
    tpu.vector_store %arg4[%c0_6, %c0_7], %10 {strides = array<i32>} : memref<8x128xf32, #tpu.memory_space<vmem>>, vector<8x128xf32>,
    return
  }
  func.func @transform_0(%arg0: i32, %arg1: i32) -> (i32, i32) {
    %c1_i32 = arith.constant 1 : i32
    %0 = arith.muli %arg0, %c1_i32 : i32
    %1 = arith.addi %0, %arg1 : i32
    %c0_i32 = arith.constant 0 : i32
    %2 = arith.minsi %1, %c0_i32 : i32
    %c0_i32_0 = arith.constant 0 : i32
    %c0_i32_1 = arith.constant 0 : i32
    return %2, %c0_i32_0 : i32, i32
  }
  func.func @transform_1(%arg0: i32, %arg1: i32) -> (i32, i32) {
    %c1_i32 = arith.constant 1 : i32
    %0 = arith.muli %arg0, %c1_i32 : i32
    %1 = arith.addi %0, %arg1 : i32
    %c0_i32 = arith.constant 0 : i32
    %2 = arith.minsi %1, %c0_i32 : i32
    %c0_i32_0 = arith.constant 0 : i32
    %c0_i32_1 = arith.constant 0 : i32
    return %2, %c0_i32_0 : i32, i32
  }
  func.func @transform_2(%arg0: i32, %arg1: i32) -> (i32, i32) {
    %c0_i32 = arith.constant 0 : i32
    %c0_i32_0 = arith.constant 0 : i32
    return %arg0, %c0_i32 : i32, i32
  }
}

</mosaic_0001>

<llo_original>
// kernel: tpu_custom_call.1
$region0: #{tpu_custom_call.1}
  #allocation0 [shape = 'u32[]', space=smem, size = 0x4, offset = 0x4, fixed_abs, tag = 'smem constant byte address 0x4 - core index']
  #allocation1 [shape = 'u32[144,128]{1,0:T(1,128)}', space=vmem, size = 0x12000, scoped, tag = 'internal scratch']
  %s0 = inlined_call_operand.hbm [shape: f32[16,128], index: 0, kind: input, shape index: {}]
  %s1 = inlined_call_operand.hbm [shape: f32[16,128], index: 1, kind: input, shape index: {}]
  %s2 = inlined_call_operand.hbm [shape: f32[8,128], index: 2, kind: output, shape index: {}]
  %s3 = sld [smem:[#allocation0]]
  $region30: #{tpu_custom_call.1} parent=0
    _
  %s5 = ssub.s32 1, %s3
  %s6 = scalar_select 0, %s5, %s3
  $region1: #{tpu_custom_call.1} parent=0
    #allocation2 [shape = 'u8[8192]{0}', space=vmem, size = 0x2000, scoped, tag = 'input window, operand 0, single buffered']
    #allocation3 [shape = 's32[1]{0}', space=sflag, size = 0x4, scoped, tag = 'scoped memory for tpu_custom_call.1']
    #allocation4 [shape = 's32[1]{0}', space=sflag, size = 0x4, scoped, tag = 'scoped memory for tpu_custom_call.1']
    #allocation5 [shape = 'u8[8192]{0}', space=vmem, size = 0x2000, scoped, tag = 'input window, operand 1, single buffered']
    #allocation6 [shape = 's32[1]{0}', space=sflag, size = 0x4, scoped, tag = 'scoped memory for tpu_custom_call.1']
    #allocation7 [shape = 'u8[4096]{0}', space=vmem, size = 0x1000, scoped, tag = 'output window, operand 0, single buffered']
    %7 = vsyncpa [#allocation3], 0
    %8 = vsyncpa [#allocation6], 0
    %9 = vsyncpa [#allocation4], 0
    // Predicated region
    $region2: #{tpu_custom_call.1} parent=1 // pred_check
      _
    $region3: #{tpu_custom_call.1} parent=1 // pred_check_branch
      %11 = sbr.rel (0) target = $region5
    $region4: #{tpu_custom_call.1} parent=1 // pred_region
      %s12 = sadd.s32 0, 0
      %p13 = scmp.lt.s32.totalorder %s12, 0
      %s14 = scalar_select %p13, %s12, 0
      %s15 = smul.u32 2, %s14
      %s17 = ssub.s32 256, 256
      %18 = vsyncadd [#allocation3], %s17
      %s19 = smul.addr %s15, 128
      %s20 = scalar_lea.hbm %s0, %s19
      %s21 = sshll.u32 [#allocation2], 4
      %s22 = int_to_ptr.vmem [resolvable:$true] %s21
      %27 = dma.hbm_to_vmem [thread:$0]  %s20, 256, %s22, [#allocation3], 128, 128, 8
    $region5: #{tpu_custom_call.1} parent=1 // pred_fallthru
      _
    // Predicated region
    $region6: #{tpu_custom_call.1} parent=1 // pred_check
      _
    $region7: #{tpu_custom_call.1} parent=1 // pred_check_branch
      %29 = sbr.rel (0) target = $region9
    $region8: #{tpu_custom_call.1} parent=1 // pred_region
      %s30 = sadd.s32 0, 0
      %p31 = scmp.lt.s32.totalorder %s30, 0
      %s32 = scalar_select %p31, %s30, 0
      %s33 = smul.u32 2, %s32
      %s35 = ssub.s32 256, 256
      %36 = vsyncadd [#allocation6], %s35
      %s37 = smul.addr %s33, 128
      %s38 = scalar_lea.hbm %s1, %s37
      %s39 = sshll.u32 [#allocation5], 4
      %s40 = int_to_ptr.vmem [resolvable:$true] %s39
      %45 = dma.hbm_to_vmem [thread:$0]  %s38, 256, %s40, [#allocation6], 128, 128, 8
    $region9: #{tpu_custom_call.1} parent=1 // pred_fallthru
      _
    // Predicated region
    $region10: #{tpu_custom_call.1} parent=1 // pred_check
      _
    $region11: #{tpu_custom_call.1} parent=1 // pred_check_branch
      %47 = sbr.rel (0) target = $region13
    $region12: #{tpu_custom_call.1} parent=1 // pred_region
      %48 = dma.done [#allocation3], 256
    $region13: #{tpu_custom_call.1} parent=1 // pred_fallthru
      _
    // Predicated region
    $region14: #{tpu_custom_call.1} parent=1 // pred_check
      _
    $region15: #{tpu_custom_call.1} parent=1 // pred_check_branch
      %50 = sbr.rel (0) target = $region17
    $region16: #{tpu_custom_call.1} parent=1 // pred_region
      %51 = dma.done [#allocation6], 256
    $region17: #{tpu_custom_call.1} parent=1 // pred_fallthru
      _
    %s52 = sadd.s32 0, 0
    %p53 = scmp.lt.s32.totalorder %s52, 0
    %s54 = scalar_select %p53, %s52, 0
    %s55 = smul.u32 2, %s54
    %s56 = sadd.s32 0, 0
    %p57 = scmp.lt.s32.totalorder %s56, 0
    %s58 = scalar_select %p57, %s56, 0
    %s59 = smul.u32 2, %s58
    %p60 = scmp.eq.s32.totalorder 0, 0
    // Predicated region
    $region18: #{tpu_custom_call.1} parent=1 // pred_check
      %p61 = pneg %p60
    $region19: #{tpu_custom_call.1} parent=1 // pred_check_branch
      %63 = sbr.rel (%p61) target = $region21
    $region20: #{tpu_custom_call.1} parent=1 // pred_region
      %64 = vst [vmem:[#allocation7] sm:$0xff] 0.0
    $region21: #{tpu_custom_call.1} parent=1 // pred_fallthru
      _
    %v65 = vld [vmem:[#allocation5] sm:$0xff]
    %v66 = vld [vmem:[#allocation5 + $0x8] sm:$0xff]
    %v67 = vld [vmem:[#allocation2] sm:$0xff]
    %v68 = vld [vmem:[#allocation2 + $0x8] sm:$0xff]
    %v69 = vsub.f32 %v65, %v67
    %v70 = vsub.f32 %v66, %v68
    %v71 = vmul.f32 %v69, %v69
    %v72 = vmul.f32 %v70, %v70
    %v73 = vld [vmem:[#allocation7] sm:$0xff]
    %v74 = vadd.f32 %v71, %v72
    %v75 = vadd.f32 %v73, %v74
    %76 = vst [vmem:[#allocation7] sm:$0xff] %v75
    // Predicated region
    $region22: #{tpu_custom_call.1} parent=1 // pred_check
      _
    $region23: #{tpu_custom_call.1} parent=1 // pred_check_branch
      %78 = sbr.rel (0) target = $region25
    $region24: #{tpu_custom_call.1} parent=1 // pred_region
      %s80 = ssub.s32 128, 128
      %81 = vsyncadd [#allocation4], %s80
      %s83 = sshll.u32 [#allocation7], 4
      %s84 = int_to_ptr.vmem [resolvable:$true] %s83
      %86 = dma.vmem_to_hbm [thread:$0]  %s84, 128, %s2, [#allocation4]
    $region25: #{tpu_custom_call.1} parent=1 // pred_fallthru
      _
    // Predicated region
    $region26: #{tpu_custom_call.1} parent=1 // pred_check
      _
    $region27: #{tpu_custom_call.1} parent=1 // pred_check_branch
      %88 = sbr.rel (0) target = $region29
    $region28: #{tpu_custom_call.1} parent=1 // pred_region
      %89 = dma.done [#allocation4], 128
    $region29: #{tpu_custom_call.1} parent=1 // pred_fallthru
      _
    %90 = vsyncpa [#allocation3], 1
    %91 = vsyncpa [#allocation6], 1
    %92 = vsyncpa [#allocation4], 1

</llo_original>
